<compile_context>
chip_gen: v6e
topology: v6e:2x2x1
jax: 0.10.0
libtpu: 0.0.40
codegen_flags: <defaults>
</compile_context>

<pallas_src>
import jax
import jax.numpy as jnp
from jax.experimental import pallas as pl
from jax.experimental.pallas import tpu as pltpu


def _leaky_relu(x, slope=0.1):
    return jnp.where(x > 0, x, slope * x)


def _round_up(x, m):
    return ((x + m - 1) // m) * m


def proprio_encoder_kernel(x_ref,
                           w1_ref, b1_ref,
                           w2_ref, b2_ref,
                           w3_ref, b3_ref,
                           w4_ref, b4_ref,
                           o_ref):
    """One (tb, 8) batch tile per grid step; weights are resident full tiles."""
    x = x_ref[...]                                    # (tb, 8)  f32

    # ---- Layer 1: 8 -> 32.  K=8 fills only 8 MXU systolic rows yet costs the
    # same push cadence as a full-K matmul, so run it on the VPU as 8 broadcast
    # multiply-adds, all f32 (VALU slots are idle while the MXU streams L2-L4).
    h = x[:, 0:1] * w1_ref[0:1, :]                    # (tb, 32)
    for k in range(1, x_ref.shape[1]):                # static, unrolled (7 FMAs)
        h = h + x[:, k:k + 1] * w1_ref[k:k + 1, :]
    h = _leaky_relu(h + b1_ref[...])

    # ---- Layers 2-4 on the MXU: bf16 inputs (weights arrive pre-cast), f32
    # accumulation; bias add + LeakyReLU stay f32 on the VPU.
    h = jnp.dot(h.astype(jnp.bfloat16), w2_ref[...],
                preferred_element_type=jnp.float32)
    h = _leaky_relu(h + b2_ref[...])

    h = jnp.dot(h.astype(jnp.bfloat16), w3_ref[...],
                preferred_element_type=jnp.float32)
    h = _leaky_relu(h + b3_ref[...])

    h = jnp.dot(h.astype(jnp.bfloat16), w4_ref[...],
                preferred_element_type=jnp.float32)
    h = _leaky_relu(h + b4_ref[...])

    o_ref[...] = h.astype(o_ref.dtype)                # (tb, 2*z_dim), un-padded


def _build_call(*, tb, in_dim, out_dim, b_pad, grid, weights, flops,
                bytes_accessed, single_buffer_weights):
    if single_buffer_weights:
        def const_spec(a):
            # Constant index map -> block never changes across grid steps; a
            # single buffer suffices (saves ~75 KB VMEM + one redundant DMA).
            return pl.BlockSpec(a.shape, lambda i: (0, 0),
                                pipeline_mode=pl.Buffered(1))
    else:
        def const_spec(a):
            return pl.BlockSpec(a.shape, lambda i: (0, 0))

    return pl.pallas_call(
        proprio_encoder_kernel,
        out_shape=jax.ShapeDtypeStruct((b_pad, out_dim), jnp.float32),
        grid=grid,
        in_specs=[pl.BlockSpec((tb, in_dim), lambda i: (i, 0))]
                 + [const_spec(a) for a in weights],
        out_specs=pl.BlockSpec((tb, out_dim), lambda i: (i, 0)),
        compiler_params=pltpu.CompilerParams(
            dimension_semantics=("parallel",)),
        cost_estimate=pl.CostEstimate(flops=flops, transcendentals=0,
                                      bytes_accessed=bytes_accessed),
    )


def proprio_encoder(proprio, params, *, block_b=2048):
    """proprio: (B, 8) f32. params: w1..w4 (in,out) f32 and b1..b4 (1,out) f32.
    Returns (B, 2*z_dim, 1), matching `self.proprio_encoder(proprio).unsqueeze(2)`."""
    B, in_dim = proprio.shape
    out_dim = params["w4"].shape[1]

    # Layers 2-4 run bf16 x bf16 -> f32 on the MXU: pre-cast those weights once
    # here so their HBM->VMEM DMA is halved too.  w1/biases stay f32 (VPU path).
    weights = (params["w1"], params["b1"],
               params["w2"].astype(jnp.bfloat16), params["b2"],
               params["w3"].astype(jnp.bfloat16), params["b3"],
               params["w4"].astype(jnp.bfloat16), params["b4"])

    # Pad batch only to a sublane multiple (8); trailing grid block may be
    # partial (rows are independent, out-of-bounds writes are dropped).
    b_pad = _round_up(B, 8)
    x = proprio if b_pad == B else jnp.pad(proprio, ((0, b_pad - B), (0, 0)))

    # Batch tile: large (amortizes per-step overhead) but capped so the grid has
    # >= 2 steps whenever possible -> both TensorCores get work on v7x.
    # tb=2048 keeps per-step VMEM at a few MiB, well under v5e's 16 MiB scoped
    # default (only go to 4096+ with an explicit vmem_limit_bytes).
    block_b = max(8, _round_up(block_b, 8))
    two_step = _round_up(pl.cdiv(b_pad, 2), 8)
    tb = max(8, min(block_b, two_step, b_pad))
    grid = (pl.cdiv(b_pad, tb),)

    flops = 2 * b_pad * (in_dim * 32 + 32 * 64 + 64 * 128 + 128 * out_dim)
    weight_bytes = sum(int(a.size) * a.dtype.itemsize for a in weights)
    bytes_accessed = 4 * b_pad * (in_dim + out_dim) + weight_bytes

    kwargs = dict(tb=tb, in_dim=in_dim, out_dim=out_dim, b_pad=b_pad,
                  grid=grid, weights=weights, flops=flops,
                  bytes_accessed=bytes_accessed)
    try:
        out = _build_call(single_buffer_weights=True, **kwargs)(x, *weights)
    except Exception:
        # This Pallas version rejects pl.Buffered(1); fall back to the default
        # double-buffered resident weights (costs ~75 KB extra VMEM).
        out = _build_call(single_buffer_weights=False, **kwargs)(x, *weights)

    # Drop batch padding, then unsqueeze(2): (B, 2*z_dim) -> (B, 2*z_dim, 1).
    return out[:B][:, :, None]


def init_params(key, z_dim):
    """Deterministic Kaiming-style init (matching init_weights intent, not a
    checkpoint).  Biases are small non-zero values so the bias path is tested."""
    dims = [8, 32, 64, 128, 2 * z_dim]
    params = {}
    keys = jax.random.split(key, 2 * (len(dims) - 1))
    for i, (d_in, d_out) in enumerate(zip(dims[:-1], dims[1:]), start=1):
        std = (2.0 / d_in) ** 0.5
        params[f"w{i}"] = (std * jax.random.normal(keys[2 * i - 2], (d_in, d_out))
                           ).astype(jnp.float32)
        params[f"b{i}"] = (0.1 * jax.random.normal(keys[2 * i - 1], (1, d_out))
                           ).astype(jnp.float32)
    return params


def _ref_forward_f32(x, p):
    """Pure-f32 reference == the PyTorch forward."""
    h = x
    for i in range(1, 5):
        h = h @ p[f"w{i}"] + p[f"b{i}"]
        h = jnp.where(h > 0, h, 0.1 * h)
    return h[:, :, None]


def _ref_forward_mixed(x, p):
    """Same bf16-input / f32-accumulate recipe as the kernel (tight check)."""
    h = x @ p["w1"] + p["b1"]
    h = jnp.where(h > 0, h, 0.1 * h)
    for i in range(2, 5):
        h = jnp.dot(h.astype(jnp.bfloat16), p[f"w{i}"].astype(jnp.bfloat16),
                    preferred_element_type=jnp.float32) + p[f"b{i}"]
        h = jnp.where(h > 0, h, 0.1 * h)
    return h[:, :, None]


if __name__ == "__main__":
    key = jax.random.PRNGKey(0)
    k_x, k_x2, k_x3, k_p = jax.random.split(key, 4)

    z_dim = 32          # output feature dim 2*z_dim = 64
    params = init_params(k_p, z_dim)

    def check(x, out):
        # bf16 MXU inputs (f32 accumulation) diverge from the pure-f32 PyTorch
        # forward at ~1e-2 relative; also check tightly vs a matched-precision
        # reference to validate the kernel plumbing.
        assert jnp.allclose(out, _ref_forward_mixed(x, params),
                            atol=1e-2, rtol=1e-2)
        assert jnp.allclose(out, _ref_forward_f32(x, params),
                            atol=5e-2, rtol=5e-2)

    # Case 1: tiny batch (single grid step).
    x1 = jax.random.normal(k_x, (8, 8), dtype=jnp.float32)
    o1 = jax.block_until_ready(proprio_encoder(x1, params))
    assert o1.shape == (8, 2 * z_dim, 1), o1.shape
    check(x1, o1)

    # Case 2: batch not a multiple of 8 -> 8-padding + partial trailing block.
    x2 = jax.random.normal(k_x2, (20, 8), dtype=jnp.float32)
    o2 = jax.block_until_ready(proprio_encoder(x2, params))
    assert o2.shape == (20, 2 * z_dim, 1), o2.shape
    check(x2, o2)

    # Case 3: multi-step batch grid (resident weights across grid steps).
    x3 = jax.random.normal(k_x3, (48, 8), dtype=jnp.float32)
    o3 = jax.block_until_ready(proprio_encoder(x3, params, block_b=16))
    assert o3.shape == (48, 2 * z_dim, 1), o3.shape
    check(x3, o3)

    print("KERNEL_OK")
</pallas_src>

<mosaic_0001>
module attributes {stable_mosaic.version = 11 : i64} {
  func.func @proprio_encoder_kernel(%arg0: i32, %arg1: memref<8x8xf32, #tpu.memory_space<vmem>>, %arg2: memref<8x32xf32, #tpu.memory_space<vmem>>, %arg3: memref<1x32xf32, #tpu.memory_space<vmem>>, %arg4: memref<32x64xbf16, #tpu.memory_space<vmem>>, %arg5: memref<1x64xf32, #tpu.memory_space<vmem>>, %arg6: memref<64x128xbf16, #tpu.memory_space<vmem>>, %arg7: memref<1x128xf32, #tpu.memory_space<vmem>>, %arg8: memref<128x64xbf16, #tpu.memory_space<vmem>>, %arg9: memref<1x64xf32, #tpu.memory_space<vmem>>, %arg10: memref<8x64xf32, #tpu.memory_space<vmem>>) attributes {dimension_semantics = [#tpu.dimension_semantics<parallel>], iteration_bounds = array<i64: 1>, scalar_prefetch = 0 : i64, scratch_operands = 0 : i64, tpu.core_type = #tpu.core_type<tc>, window_params = [{transform_indices = @transform_0, window_bounds = array<i64: 8, 8>}, {pipeline_mode = #tpu.pipeline_mode<synchronous>, transform_indices = @transform_1, window_bounds = array<i64: 8, 32>}, {pipeline_mode = #tpu.pipeline_mode<synchronous>, transform_indices = @transform_2, window_bounds = array<i64: 1, 32>}, {pipeline_mode = #tpu.pipeline_mode<synchronous>, transform_indices = @transform_3, window_bounds = array<i64: 32, 64>}, {pipeline_mode = #tpu.pipeline_mode<synchronous>, transform_indices = @transform_4, window_bounds = array<i64: 1, 64>}, {pipeline_mode = #tpu.pipeline_mode<synchronous>, transform_indices = @transform_5, window_bounds = array<i64: 64, 128>}, {pipeline_mode = #tpu.pipeline_mode<synchronous>, transform_indices = @transform_6, window_bounds = array<i64: 1, 128>}, {pipeline_mode = #tpu.pipeline_mode<synchronous>, transform_indices = @transform_7, window_bounds = array<i64: 128, 64>}, {pipeline_mode = #tpu.pipeline_mode<synchronous>, transform_indices = @transform_8, window_bounds = array<i64: 1, 64>}, {transform_indices = @transform_9, window_bounds = array<i64: 8, 64>}]} {
    %c0 = arith.constant 0 : index
    %c0_0 = arith.constant 0 : index
    %0 = vector.load %arg1[%c0, %c0_0] : memref<8x8xf32, #tpu.memory_space<vmem>>, vector<8x8xf32>
    %1 = vector.extract_strided_slice %0 {offsets = [0, 0], sizes = [8, 1], strides = [1, 1]} : vector<8x8xf32> to vector<8x1xf32>
    %c0_1 = arith.constant 0 : index
    %c0_2 = arith.constant 0 : index
    %2 = vector.load %arg2[%c0_1, %c0_2] : memref<8x32xf32, #tpu.memory_space<vmem>>, vector<1x32xf32>
    %3 = vector.broadcast %1 : vector<8x1xf32> to vector<8x32xf32>
    %4 = vector.broadcast %2 : vector<1x32xf32> to vector<8x32xf32>
    %5 = arith.mulf %3, %4 : vector<8x32xf32>
    %6 = vector.extract_strided_slice %0 {offsets = [0, 1], sizes = [8, 1], strides = [1, 1]} : vector<8x8xf32> to vector<8x1xf32>
    %c1 = arith.constant 1 : index
    %c0_3 = arith.constant 0 : index
    %7 = vector.load %arg2[%c1, %c0_3] : memref<8x32xf32, #tpu.memory_space<vmem>>, vector<1x32xf32>
    %8 = vector.broadcast %6 : vector<8x1xf32> to vector<8x32xf32>
    %9 = vector.broadcast %7 : vector<1x32xf32> to vector<8x32xf32>
    %10 = arith.mulf %8, %9 : vector<8x32xf32>
    %11 = arith.addf %5, %10 : vector<8x32xf32>
    %12 = vector.extract_strided_slice %0 {offsets = [0, 2], sizes = [8, 1], strides = [1, 1]} : vector<8x8xf32> to vector<8x1xf32>
    %c2 = arith.constant 2 : index
    %c0_4 = arith.constant 0 : index
    %13 = vector.load %arg2[%c2, %c0_4] : memref<8x32xf32, #tpu.memory_space<vmem>>, vector<1x32xf32>
    %14 = vector.broadcast %12 : vector<8x1xf32> to vector<8x32xf32>
    %15 = vector.broadcast %13 : vector<1x32xf32> to vector<8x32xf32>
    %16 = arith.mulf %14, %15 : vector<8x32xf32>
    %17 = arith.addf %11, %16 : vector<8x32xf32>
    %18 = vector.extract_strided_slice %0 {offsets = [0, 3], sizes = [8, 1], strides = [1, 1]} : vector<8x8xf32> to vector<8x1xf32>
    %c3 = arith.constant 3 : index
    %c0_5 = arith.constant 0 : index
    %19 = vector.load %arg2[%c3, %c0_5] : memref<8x32xf32, #tpu.memory_space<vmem>>, vector<1x32xf32>
    %20 = vector.broadcast %18 : vector<8x1xf32> to vector<8x32xf32>
    %21 = vector.broadcast %19 : vector<1x32xf32> to vector<8x32xf32>
    %22 = arith.mulf %20, %21 : vector<8x32xf32>
    %23 = arith.addf %17, %22 : vector<8x32xf32>
    %24 = vector.extract_strided_slice %0 {offsets = [0, 4], sizes = [8, 1], strides = [1, 1]} : vector<8x8xf32> to vector<8x1xf32>
    %c4 = arith.constant 4 : index
    %c0_6 = arith.constant 0 : index
    %25 = vector.load %arg2[%c4, %c0_6] : memref<8x32xf32, #tpu.memory_space<vmem>>, vector<1x32xf32>
    %26 = vector.broadcast %24 : vector<8x1xf32> to vector<8x32xf32>
    %27 = vector.broadcast %25 : vector<1x32xf32> to vector<8x32xf32>
    %28 = arith.mulf %26, %27 : vector<8x32xf32>
    %29 = arith.addf %23, %28 : vector<8x32xf32>
    %30 = vector.extract_strided_slice %0 {offsets = [0, 5], sizes = [8, 1], strides = [1, 1]} : vector<8x8xf32> to vector<8x1xf32>
    %c5 = arith.constant 5 : index
    %c0_7 = arith.constant 0 : index
    %31 = vector.load %arg2[%c5, %c0_7] : memref<8x32xf32, #tpu.memory_space<vmem>>, vector<1x32xf32>
    %32 = vector.broadcast %30 : vector<8x1xf32> to vector<8x32xf32>
    %33 = vector.broadcast %31 : vector<1x32xf32> to vector<8x32xf32>
    %34 = arith.mulf %32, %33 : vector<8x32xf32>
    %35 = arith.addf %29, %34 : vector<8x32xf32>
    %36 = vector.extract_strided_slice %0 {offsets = [0, 6], sizes = [8, 1], strides = [1, 1]} : vector<8x8xf32> to vector<8x1xf32>
    %c6 = arith.constant 6 : index
    %c0_8 = arith.constant 0 : index
    %37 = vector.load %arg2[%c6, %c0_8] : memref<8x32xf32, #tpu.memory_space<vmem>>, vector<1x32xf32>
    %38 = vector.broadcast %36 : vector<8x1xf32> to vector<8x32xf32>
    %39 = vector.broadcast %37 : vector<1x32xf32> to vector<8x32xf32>
    %40 = arith.mulf %38, %39 : vector<8x32xf32>
    %41 = arith.addf %35, %40 : vector<8x32xf32>
    %42 = vector.extract_strided_slice %0 {offsets = [0, 7], sizes = [8, 1], strides = [1, 1]} : vector<8x8xf32> to vector<8x1xf32>
    %c7 = arith.constant 7 : index
    %c0_9 = arith.constant 0 : index
    %43 = vector.load %arg2[%c7, %c0_9] : memref<8x32xf32, #tpu.memory_space<vmem>>, vector<1x32xf32>
    %44 = vector.broadcast %42 : vector<8x1xf32> to vector<8x32xf32>
    %45 = vector.broadcast %43 : vector<1x32xf32> to vector<8x32xf32>
    %46 = arith.mulf %44, %45 : vector<8x32xf32>
    %47 = arith.addf %41, %46 : vector<8x32xf32>
    %c0_10 = arith.constant 0 : index
    %c0_11 = arith.constant 0 : index
    %48 = vector.load %arg3[%c0_10, %c0_11] : memref<1x32xf32, #tpu.memory_space<vmem>>, vector<1x32xf32>
    %49 = vector.broadcast %48 : vector<1x32xf32> to vector<8x32xf32>
    %50 = arith.addf %47, %49 : vector<8x32xf32>
    %cst = arith.constant 0.000000e+00 : f32
    %51 = vector.broadcast %cst : f32 to vector<8x32xf32>
    %52 = arith.cmpf ogt, %50, %51 : vector<8x32xf32>
    %cst_12 = arith.constant 1.000000e-01 : f32
    %53 = vector.broadcast %cst_12 : f32 to vector<8x32xf32>
    %54 = arith.mulf %53, %50 : vector<8x32xf32>
    %55 = arith.select %52, %50, %54 : vector<8x32xi1>, vector<8x32xf32>
    %56 = arith.truncf %55 : vector<8x32xf32> to vector<8x32xbf16>
    %c0_13 = arith.constant 0 : index
    %c0_14 = arith.constant 0 : index
    %57 = vector.load %arg4[%c0_13, %c0_14] : memref<32x64xbf16, #tpu.memory_space<vmem>>, vector<32x64xbf16>
    %cst_15 = arith.constant dense<0.000000e+00> : vector<8x64xf32>
    %58 = tpu.matmul %56, %57, %cst_15 {dimension_numbers = #tpu.dot_dimension_numbers<[1], [0], [0], [1], [0, 0, 1, 1], [], []>} : vector<8x32xbf16>, vector<32x64xbf16>, vector<8x64xf32> -> vector<8x64xf32>
    %c0_16 = arith.constant 0 : index
    %c0_17 = arith.constant 0 : index
    %59 = vector.load %arg5[%c0_16, %c0_17] : memref<1x64xf32, #tpu.memory_space<vmem>>, vector<1x64xf32>
    %60 = vector.broadcast %59 : vector<1x64xf32> to vector<8x64xf32>
    %61 = arith.addf %58, %60 : vector<8x64xf32>
    %cst_18 = arith.constant 0.000000e+00 : f32
    %62 = vector.broadcast %cst_18 : f32 to vector<8x64xf32>
    %63 = arith.cmpf ogt, %61, %62 : vector<8x64xf32>
    %cst_19 = arith.constant 1.000000e-01 : f32
    %64 = vector.broadcast %cst_19 : f32 to vector<8x64xf32>
    %65 = arith.mulf %64, %61 : vector<8x64xf32>
    %66 = arith.select %63, %61, %65 : vector<8x64xi1>, vector<8x64xf32>
    %67 = arith.truncf %66 : vector<8x64xf32> to vector<8x64xbf16>
    %c0_20 = arith.constant 0 : index
    %c0_21 = arith.constant 0 : index
    %68 = vector.load %arg6[%c0_20, %c0_21] : memref<64x128xbf16, #tpu.memory_space<vmem>>, vector<64x128xbf16>
    %cst_22 = arith.constant dense<0.000000e+00> : vector<8x128xf32>
    %69 = tpu.matmul %67, %68, %cst_22 {dimension_numbers = #tpu.dot_dimension_numbers<[1], [0], [0], [1], [0, 0, 1, 1], [], []>} : vector<8x64xbf16>, vector<64x128xbf16>, vector<8x128xf32> -> vector<8x128xf32>
    %c0_23 = arith.constant 0 : index
    %c0_24 = arith.constant 0 : index
    %70 = vector.load %arg7[%c0_23, %c0_24] : memref<1x128xf32, #tpu.memory_space<vmem>>, vector<1x128xf32>
    %71 = vector.broadcast %70 : vector<1x128xf32> to vector<8x128xf32>
    %72 = arith.addf %69, %71 : vector<8x128xf32>
    %cst_25 = arith.constant 0.000000e+00 : f32
    %73 = vector.broadcast %cst_25 : f32 to vector<8x128xf32>
    %74 = arith.cmpf ogt, %72, %73 : vector<8x128xf32>
    %cst_26 = arith.constant 1.000000e-01 : f32
    %75 = vector.broadcast %cst_26 : f32 to vector<8x128xf32>
    %76 = arith.mulf %75, %72 : vector<8x128xf32>
    %77 = arith.select %74, %72, %76 : vector<8x128xi1>, vector<8x128xf32>
    %78 = arith.truncf %77 : vector<8x128xf32> to vector<8x128xbf16>
    %c0_27 = arith.constant 0 : index
    %c0_28 = arith.constant 0 : index
    %79 = vector.load %arg8[%c0_27, %c0_28] : memref<128x64xbf16, #tpu.memory_space<vmem>>, vector<128x64xbf16>
    %cst_29 = arith.constant dense<0.000000e+00> : vector<8x64xf32>
    %80 = tpu.matmul %78, %79, %cst_29 {dimension_numbers = #tpu.dot_dimension_numbers<[1], [0], [0], [1], [0, 0, 1, 1], [], []>} : vector<8x128xbf16>, vector<128x64xbf16>, vector<8x64xf32> -> vector<8x64xf32>
    %c0_30 = arith.constant 0 : index
    %c0_31 = arith.constant 0 : index
    %81 = vector.load %arg9[%c0_30, %c0_31] : memref<1x64xf32, #tpu.memory_space<vmem>>, vector<1x64xf32>
    %82 = vector.broadcast %81 : vector<1x64xf32> to vector<8x64xf32>
    %83 = arith.addf %80, %82 : vector<8x64xf32>
    %cst_32 = arith.constant 0.000000e+00 : f32
    %84 = vector.broadcast %cst_32 : f32 to vector<8x64xf32>
    %85 = arith.cmpf ogt, %83, %84 : vector<8x64xf32>
    %cst_33 = arith.constant 1.000000e-01 : f32
    %86 = vector.broadcast %cst_33 : f32 to vector<8x64xf32>
    %87 = arith.mulf %86, %83 : vector<8x64xf32>
    %88 = arith.select %85, %83, %87 : vector<8x64xi1>, vector<8x64xf32>
    %c0_34 = arith.constant 0 : index
    %c0_35 = arith.constant 0 : index
    %89 = vector.load %arg10[%c0_34, %c0_35] : memref<8x64xf32, #tpu.memory_space<vmem>>, vector<8x64xf32>
    tpu.vector_store %arg10[%c0_34, %c0_35], %88 {strides = array<i32>} : memref<8x64xf32, #tpu.memory_space<vmem>>, vector<8x64xf32>,
    return
  }
  func.func @transform_0(%arg0: i32) -> (i32, i32) {
    %c0_i32 = arith.constant 0 : i32
    %c0_i32_0 = arith.constant 0 : i32
    return %arg0, %c0_i32 : i32, i32
  }
  func.func @transform_1(%arg0: i32) -> (i32, i32) {
    %c0_i32 = arith.constant 0 : i32
    %c0_i32_0 = arith.constant 0 : i32
    %c0_i32_1 = arith.constant 0 : i32
    return %c0_i32, %c0_i32_0 : i32, i32
  }
  func.func @transform_2(%arg0: i32) -> (i32, i32) {
    %c0_i32 = arith.constant 0 : i32
    %c0_i32_0 = arith.constant 0 : i32
    %c0_i32_1 = arith.constant 0 : i32
    return %c0_i32, %c0_i32_0 : i32, i32
  }
  func.func @transform_3(%arg0: i32) -> (i32, i32) {
    %c0_i32 = arith.constant 0 : i32
    %c0_i32_0 = arith.constant 0 : i32
    %c0_i32_1 = arith.constant 0 : i32
    return %c0_i32, %c0_i32_0 : i32, i32
  }
  func.func @transform_4(%arg0: i32) -> (i32, i32) {
    %c0_i32 = arith.constant 0 : i32
    %c0_i32_0 = arith.constant 0 : i32
    %c0_i32_1 = arith.constant 0 : i32
    return %c0_i32, %c0_i32_0 : i32, i32
  }
  func.func @transform_5(%arg0: i32) -> (i32, i32) {
    %c0_i32 = arith.constant 0 : i32
    %c0_i32_0 = arith.constant 0 : i32
    %c0_i32_1 = arith.constant 0 : i32
    return %c0_i32, %c0_i32_0 : i32, i32
  }
  func.func @transform_6(%arg0: i32) -> (i32, i32) {
    %c0_i32 = arith.constant 0 : i32
    %c0_i32_0 = arith.constant 0 : i32
    %c0_i32_1 = arith.constant 0 : i32
    return %c0_i32, %c0_i32_0 : i32, i32
  }
  func.func @transform_7(%arg0: i32) -> (i32, i32) {
    %c0_i32 = arith.constant 0 : i32
    %c0_i32_0 = arith.constant 0 : i32
    %c0_i32_1 = arith.constant 0 : i32
    return %c0_i32, %c0_i32_0 : i32, i32
  }
  func.func @transform_8(%arg0: i32) -> (i32, i32) {
    %c0_i32 = arith.constant 0 : i32
    %c0_i32_0 = arith.constant 0 : i32
    %c0_i32_1 = arith.constant 0 : i32
    return %c0_i32, %c0_i32_0 : i32, i32
  }
  func.func @transform_9(%arg0: i32) -> (i32, i32) {
    %c0_i32 = arith.constant 0 : i32
    %c0_i32_0 = arith.constant 0 : i32
    return %arg0, %c0_i32 : i32, i32
  }
}

module attributes {stable_mosaic.version = 11 : i64} {
  func.func @proprio_encoder_kernel(%arg0: i32, %arg1: memref<8x8xf32, #tpu.memory_space<vmem>>, %arg2: memref<8x32xf32, #tpu.memory_space<vmem>>, %arg3: memref<1x32xf32, #tpu.memory_space<vmem>>, %arg4: memref<32x64xbf16, #tpu.memory_space<vmem>>, %arg5: memref<1x64xf32, #tpu.memory_space<vmem>>, %arg6: memref<64x128xbf16, #tpu.memory_space<vmem>>, %arg7: memref<1x128xf32, #tpu.memory_space<vmem>>, %arg8: memref<128x64xbf16, #tpu.memory_space<vmem>>, %arg9: memref<1x64xf32, #tpu.memory_space<vmem>>, %arg10: memref<8x64xf32, #tpu.memory_space<vmem>>) attributes {dimension_semantics = [#tpu.dimension_semantics<parallel>], iteration_bounds = array<i64: 1>, scalar_prefetch = 0 : i64, scratch_operands = 0 : i64, tpu.core_type = #tpu.core_type<tc>, window_params = [{transform_indices = @transform_0, window_bounds = array<i64: 8, 8>}, {pipeline_mode = #tpu.pipeline_mode<synchronous>, transform_indices = @transform_1, window_bounds = array<i64: 8, 32>}, {pipeline_mode = #tpu.pipeline_mode<synchronous>, transform_indices = @transform_2, window_bounds = array<i64: 1, 32>}, {pipeline_mode = #tpu.pipeline_mode<synchronous>, transform_indices = @transform_3, window_bounds = array<i64: 32, 64>}, {pipeline_mode = #tpu.pipeline_mode<synchronous>, transform_indices = @transform_4, window_bounds = array<i64: 1, 64>}, {pipeline_mode = #tpu.pipeline_mode<synchronous>, transform_indices = @transform_5, window_bounds = array<i64: 64, 128>}, {pipeline_mode = #tpu.pipeline_mode<synchronous>, transform_indices = @transform_6, window_bounds = array<i64: 1, 128>}, {pipeline_mode = #tpu.pipeline_mode<synchronous>, transform_indices = @transform_7, window_bounds = array<i64: 128, 64>}, {pipeline_mode = #tpu.pipeline_mode<synchronous>, transform_indices = @transform_8, window_bounds = array<i64: 1, 64>}, {transform_indices = @transform_9, window_bounds = array<i64: 8, 64>}]} {
    %c0 = arith.constant 0 : index
    %c0_0 = arith.constant 0 : index
    %0 = vector.load %arg1[%c0, %c0_0] : memref<8x8xf32, #tpu.memory_space<vmem>>, vector<8x8xf32>
    %1 = vector.extract_strided_slice %0 {offsets = [0, 0], sizes = [8, 1], strides = [1, 1]} : vector<8x8xf32> to vector<8x1xf32>
    %c0_1 = arith.constant 0 : index
    %c0_2 = arith.constant 0 : index
    %2 = vector.load %arg2[%c0_1, %c0_2] : memref<8x32xf32, #tpu.memory_space<vmem>>, vector<1x32xf32>
    %3 = vector.broadcast %1 : vector<8x1xf32> to vector<8x32xf32>
    %4 = vector.broadcast %2 : vector<1x32xf32> to vector<8x32xf32>
    %5 = arith.mulf %3, %4 : vector<8x32xf32>
    %6 = vector.extract_strided_slice %0 {offsets = [0, 1], sizes = [8, 1], strides = [1, 1]} : vector<8x8xf32> to vector<8x1xf32>
    %c1 = arith.constant 1 : index
    %c0_3 = arith.constant 0 : index
    %7 = vector.load %arg2[%c1, %c0_3] : memref<8x32xf32, #tpu.memory_space<vmem>>, vector<1x32xf32>
    %8 = vector.broadcast %6 : vector<8x1xf32> to vector<8x32xf32>
    %9 = vector.broadcast %7 : vector<1x32xf32> to vector<8x32xf32>
    %10 = arith.mulf %8, %9 : vector<8x32xf32>
    %11 = arith.addf %5, %10 : vector<8x32xf32>
    %12 = vector.extract_strided_slice %0 {offsets = [0, 2], sizes = [8, 1], strides = [1, 1]} : vector<8x8xf32> to vector<8x1xf32>
    %c2 = arith.constant 2 : index
    %c0_4 = arith.constant 0 : index
    %13 = vector.load %arg2[%c2, %c0_4] : memref<8x32xf32, #tpu.memory_space<vmem>>, vector<1x32xf32>
    %14 = vector.broadcast %12 : vector<8x1xf32> to vector<8x32xf32>
    %15 = vector.broadcast %13 : vector<1x32xf32> to vector<8x32xf32>
    %16 = arith.mulf %14, %15 : vector<8x32xf32>
    %17 = arith.addf %11, %16 : vector<8x32xf32>
    %18 = vector.extract_strided_slice %0 {offsets = [0, 3], sizes = [8, 1], strides = [1, 1]} : vector<8x8xf32> to vector<8x1xf32>
    %c3 = arith.constant 3 : index
    %c0_5 = arith.constant 0 : index
    %19 = vector.load %arg2[%c3, %c0_5] : memref<8x32xf32, #tpu.memory_space<vmem>>, vector<1x32xf32>
    %20 = vector.broadcast %18 : vector<8x1xf32> to vector<8x32xf32>
    %21 = vector.broadcast %19 : vector<1x32xf32> to vector<8x32xf32>
    %22 = arith.mulf %20, %21 : vector<8x32xf32>
    %23 = arith.addf %17, %22 : vector<8x32xf32>
    %24 = vector.extract_strided_slice %0 {offsets = [0, 4], sizes = [8, 1], strides = [1, 1]} : vector<8x8xf32> to vector<8x1xf32>
    %c4 = arith.constant 4 : index
    %c0_6 = arith.constant 0 : index
    %25 = vector.load %arg2[%c4, %c0_6] : memref<8x32xf32, #tpu.memory_space<vmem>>, vector<1x32xf32>
    %26 = vector.broadcast %24 : vector<8x1xf32> to vector<8x32xf32>
    %27 = vector.broadcast %25 : vector<1x32xf32> to vector<8x32xf32>
    %28 = arith.mulf %26, %27 : vector<8x32xf32>
    %29 = arith.addf %23, %28 : vector<8x32xf32>
    %30 = vector.extract_strided_slice %0 {offsets = [0, 5], sizes = [8, 1], strides = [1, 1]} : vector<8x8xf32> to vector<8x1xf32>
    %c5 = arith.constant 5 : index
    %c0_7 = arith.constant 0 : index
    %31 = vector.load %arg2[%c5, %c0_7] : memref<8x32xf32, #tpu.memory_space<vmem>>, vector<1x32xf32>
    %32 = vector.broadcast %30 : vector<8x1xf32> to vector<8x32xf32>
    %33 = vector.broadcast %31 : vector<1x32xf32> to vector<8x32xf32>
    %34 = arith.mulf %32, %33 : vector<8x32xf32>
    %35 = arith.addf %29, %34 : vector<8x32xf32>
    %36 = vector.extract_strided_slice %0 {offsets = [0, 6], sizes = [8, 1], strides = [1, 1]} : vector<8x8xf32> to vector<8x1xf32>
    %c6 = arith.constant 6 : index
    %c0_8 = arith.constant 0 : index
    %37 = vector.load %arg2[%c6, %c0_8] : memref<8x32xf32, #tpu.memory_space<vmem>>, vector<1x32xf32>
    %38 = vector.broadcast %36 : vector<8x1xf32> to vector<8x32xf32>
    %39 = vector.broadcast %37 : vector<1x32xf32> to vector<8x32xf32>
    %40 = arith.mulf %38, %39 : vector<8x32xf32>
    %41 = arith.addf %35, %40 : vector<8x32xf32>
    %42 = vector.extract_strided_slice %0 {offsets = [0, 7], sizes = [8, 1], strides = [1, 1]} : vector<8x8xf32> to vector<8x1xf32>
    %c7 = arith.constant 7 : index
    %c0_9 = arith.constant 0 : index
    %43 = vector.load %arg2[%c7, %c0_9] : memref<8x32xf32, #tpu.memory_space<vmem>>, vector<1x32xf32>
    %44 = vector.broadcast %42 : vector<8x1xf32> to vector<8x32xf32>
    %45 = vector.broadcast %43 : vector<1x32xf32> to vector<8x32xf32>
    %46 = arith.mulf %44, %45 : vector<8x32xf32>
    %47 = arith.addf %41, %46 : vector<8x32xf32>
    %c0_10 = arith.constant 0 : index
    %c0_11 = arith.constant 0 : index
    %48 = vector.load %arg3[%c0_10, %c0_11] : memref<1x32xf32, #tpu.memory_space<vmem>>, vector<1x32xf32>
    %49 = vector.broadcast %48 : vector<1x32xf32> to vector<8x32xf32>
    %50 = arith.addf %47, %49 : vector<8x32xf32>
    %cst = arith.constant 0.000000e+00 : f32
    %51 = vector.broadcast %cst : f32 to vector<8x32xf32>
    %52 = arith.cmpf ogt, %50, %51 : vector<8x32xf32>
    %cst_12 = arith.constant 1.000000e-01 : f32
    %53 = vector.broadcast %cst_12 : f32 to vector<8x32xf32>
    %54 = arith.mulf %53, %50 : vector<8x32xf32>
    %55 = arith.select %52, %50, %54 : vector<8x32xi1>, vector<8x32xf32>
    %56 = arith.truncf %55 : vector<8x32xf32> to vector<8x32xbf16>
    %c0_13 = arith.constant 0 : index
    %c0_14 = arith.constant 0 : index
    %57 = vector.load %arg4[%c0_13, %c0_14] : memref<32x64xbf16, #tpu.memory_space<vmem>>, vector<32x64xbf16>
    %cst_15 = arith.constant dense<0.000000e+00> : vector<8x64xf32>
    %58 = tpu.matmul %56, %57, %cst_15 {dimension_numbers = #tpu.dot_dimension_numbers<[1], [0], [0], [1], [0, 0, 1, 1], [], []>} : vector<8x32xbf16>, vector<32x64xbf16>, vector<8x64xf32> -> vector<8x64xf32>
    %c0_16 = arith.constant 0 : index
    %c0_17 = arith.constant 0 : index
    %59 = vector.load %arg5[%c0_16, %c0_17] : memref<1x64xf32, #tpu.memory_space<vmem>>, vector<1x64xf32>
    %60 = vector.broadcast %59 : vector<1x64xf32> to vector<8x64xf32>
    %61 = arith.addf %58, %60 : vector<8x64xf32>
    %cst_18 = arith.constant 0.000000e+00 : f32
    %62 = vector.broadcast %cst_18 : f32 to vector<8x64xf32>
    %63 = arith.cmpf ogt, %61, %62 : vector<8x64xf32>
    %cst_19 = arith.constant 1.000000e-01 : f32
    %64 = vector.broadcast %cst_19 : f32 to vector<8x64xf32>
    %65 = arith.mulf %64, %61 : vector<8x64xf32>
    %66 = arith.select %63, %61, %65 : vector<8x64xi1>, vector<8x64xf32>
    %67 = arith.truncf %66 : vector<8x64xf32> to vector<8x64xbf16>
    %c0_20 = arith.constant 0 : index
    %c0_21 = arith.constant 0 : index
    %68 = vector.load %arg6[%c0_20, %c0_21] : memref<64x128xbf16, #tpu.memory_space<vmem>>, vector<64x128xbf16>
    %cst_22 = arith.constant dense<0.000000e+00> : vector<8x128xf32>
    %69 = tpu.matmul %67, %68, %cst_22 {dimension_numbers = #tpu.dot_dimension_numbers<[1], [0], [0], [1], [0, 0, 1, 1], [], []>} : vector<8x64xbf16>, vector<64x128xbf16>, vector<8x128xf32> -> vector<8x128xf32>
    %c0_23 = arith.constant 0 : index
    %c0_24 = arith.constant 0 : index
    %70 = vector.load %arg7[%c0_23, %c0_24] : memref<1x128xf32, #tpu.memory_space<vmem>>, vector<1x128xf32>
    %71 = vector.broadcast %70 : vector<1x128xf32> to vector<8x128xf32>
    %72 = arith.addf %69, %71 : vector<8x128xf32>
    %cst_25 = arith.constant 0.000000e+00 : f32
    %73 = vector.broadcast %cst_25 : f32 to vector<8x128xf32>
    %74 = arith.cmpf ogt, %72, %73 : vector<8x128xf32>
    %cst_26 = arith.constant 1.000000e-01 : f32
    %75 = vector.broadcast %cst_26 : f32 to vector<8x128xf32>
    %76 = arith.mulf %75, %72 : vector<8x128xf32>
    %77 = arith.select %74, %72, %76 : vector<8x128xi1>, vector<8x128xf32>
    %78 = arith.truncf %77 : vector<8x128xf32> to vector<8x128xbf16>
    %c0_27 = arith.constant 0 : index
    %c0_28 = arith.constant 0 : index
    %79 = vector.load %arg8[%c0_27, %c0_28] : memref<128x64xbf16, #tpu.memory_space<vmem>>, vector<128x64xbf16>
    %cst_29 = arith.constant dense<0.000000e+00> : vector<8x64xf32>
    %80 = tpu.matmul %78, %79, %cst_29 {dimension_numbers = #tpu.dot_dimension_numbers<[1], [0], [0], [1], [0, 0, 1, 1], [], []>} : vector<8x128xbf16>, vector<128x64xbf16>, vector<8x64xf32> -> vector<8x64xf32>
    %c0_30 = arith.constant 0 : index
    %c0_31 = arith.constant 0 : index
    %81 = vector.load %arg9[%c0_30, %c0_31] : memref<1x64xf32, #tpu.memory_space<vmem>>, vector<1x64xf32>
    %82 = vector.broadcast %81 : vector<1x64xf32> to vector<8x64xf32>
    %83 = arith.addf %80, %82 : vector<8x64xf32>
    %cst_32 = arith.constant 0.000000e+00 : f32
    %84 = vector.broadcast %cst_32 : f32 to vector<8x64xf32>
    %85 = arith.cmpf ogt, %83, %84 : vector<8x64xf32>
    %cst_33 = arith.constant 1.000000e-01 : f32
    %86 = vector.broadcast %cst_33 : f32 to vector<8x64xf32>
    %87 = arith.mulf %86, %83 : vector<8x64xf32>
    %88 = arith.select %85, %83, %87 : vector<8x64xi1>, vector<8x64xf32>
    %c0_34 = arith.constant 0 : index
    %c0_35 = arith.constant 0 : index
    %89 = vector.load %arg10[%c0_34, %c0_35] : memref<8x64xf32, #tpu.memory_space<vmem>>, vector<8x64xf32>
    tpu.vector_store %arg10[%c0_34, %c0_35], %88 {strides = array<i32>} : memref<8x64xf32, #tpu.memory_space<vmem>>, vector<8x64xf32>,
    return
  }
  func.func @transform_0(%arg0: i32) -> (i32, i32) {
    %c0_i32 = arith.constant 0 : i32
    %c0_i32_0 = arith.constant 0 : i32
    return %arg0, %c0_i32 : i32, i32
  }
  func.func @transform_1(%arg0: i32) -> (i32, i32) {
    %c0_i32 = arith.constant 0 : i32
    %c0_i32_0 = arith.constant 0 : i32
    %c0_i32_1 = arith.constant 0 : i32
    return %c0_i32, %c0_i32_0 : i32, i32
  }
  func.func @transform_2(%arg0: i32) -> (i32, i32) {
    %c0_i32 = arith.constant 0 : i32
    %c0_i32_0 = arith.constant 0 : i32
    %c0_i32_1 = arith.constant 0 : i32
    return %c0_i32, %c0_i32_0 : i32, i32
  }
  func.func @transform_3(%arg0: i32) -> (i32, i32) {
    %c0_i32 = arith.constant 0 : i32
    %c0_i32_0 = arith.constant 0 : i32
    %c0_i32_1 = arith.constant 0 : i32
    return %c0_i32, %c0_i32_0 : i32, i32
  }
  func.func @transform_4(%arg0: i32) -> (i32, i32) {
    %c0_i32 = arith.constant 0 : i32
    %c0_i32_0 = arith.constant 0 : i32
    %c0_i32_1 = arith.constant 0 : i32
    return %c0_i32, %c0_i32_0 : i32, i32
  }
  func.func @transform_5(%arg0: i32) -> (i32, i32) {
    %c0_i32 = arith.constant 0 : i32
    %c0_i32_0 = arith.constant 0 : i32
    %c0_i32_1 = arith.constant 0 : i32
    return %c0_i32, %c0_i32_0 : i32, i32
  }
  func.func @transform_6(%arg0: i32) -> (i32, i32) {
    %c0_i32 = arith.constant 0 : i32
    %c0_i32_0 = arith.constant 0 : i32
    %c0_i32_1 = arith.constant 0 : i32
    return %c0_i32, %c0_i32_0 : i32, i32
  }
  func.func @transform_7(%arg0: i32) -> (i32, i32) {
    %c0_i32 = arith.constant 0 : i32
    %c0_i32_0 = arith.constant 0 : i32
    %c0_i32_1 = arith.constant 0 : i32
    return %c0_i32, %c0_i32_0 : i32, i32
  }
  func.func @transform_8(%arg0: i32) -> (i32, i32) {
    %c0_i32 = arith.constant 0 : i32
    %c0_i32_0 = arith.constant 0 : i32
    %c0_i32_1 = arith.constant 0 : i32
    return %c0_i32, %c0_i32_0 : i32, i32
  }
  func.func @transform_9(%arg0: i32) -> (i32, i32) {
    %c0_i32 = arith.constant 0 : i32
    %c0_i32_0 = arith.constant 0 : i32
    return %arg0, %c0_i32 : i32, i32
  }
}

</mosaic_0001>

<llo_original>
// kernel: tpu_custom_call.1
$region0: #{tpu_custom_call.1}
  #allocation0 [shape = 'u32[]', space=smem, size = 0x4, offset = 0x4, fixed_abs, tag = 'smem constant byte address 0x4 - core index']
  #allocation1 [shape = 'u32[144,128]{1,0:T(1,128)}', space=vmem, size = 0x12000, scoped, tag = 'internal scratch']
  %s0 = inlined_call_operand.vmem [shape: f32[8,8], index: 0, kind: input, shape index: {}]
  %s1 = inlined_call_operand.vmem [shape: f32[8,32], index: 1, kind: input, shape index: {}]
  %s2 = inlined_call_operand.vmem [shape: f32[1,32], index: 2, kind: input, shape index: {}]
  %s3 = inlined_call_operand.vmem [shape: bf16[32,64], index: 3, kind: input, shape index: {}]
  %s4 = inlined_call_operand.vmem [shape: f32[1,64], index: 4, kind: input, shape index: {}]
  %s5 = inlined_call_operand.vmem [shape: bf16[64,128], index: 5, kind: input, shape index: {}]
  %s6 = inlined_call_operand.vmem [shape: f32[1,128], index: 6, kind: input, shape index: {}]
  %s7 = inlined_call_operand.vmem [shape: bf16[128,64], index: 7, kind: input, shape index: {}]
  %s8 = inlined_call_operand.vmem [shape: f32[1,64], index: 8, kind: input, shape index: {}]
  %s9 = inlined_call_operand.hbm [shape: f32[8,64], index: 9, kind: output, shape index: {}]
  %s10 = sld [smem:[#allocation0]]
  $region46: #{tpu_custom_call.1} parent=0
    _
  %s12 = ssub.s32 1, %s10
  %s13 = scalar_select 0, %s12, %s10
  $region1: #{tpu_custom_call.1} parent=0
    #allocation2 [shape = 'u8[4096]{0}', space=vmem, size = 0x1000, scoped, tag = 'output window, operand 0, single buffered']
    #allocation3 [shape = 's32[1]{0}', space=sflag, size = 0x4, scoped, tag = 'scoped memory for tpu_custom_call.1']
    %14 = vsyncpa [#allocation3], 0
    // Predicated region
    $region2: #{tpu_custom_call.1} parent=1 // pred_check
      _
    $region3: #{tpu_custom_call.1} parent=1 // pred_check_branch
      %16 = sbr.rel (0) target = $region5
    $region4: #{tpu_custom_call.1} parent=1 // pred_region
      _
    $region5: #{tpu_custom_call.1} parent=1 // pred_fallthru
      _
    // Predicated region
    $region6: #{tpu_custom_call.1} parent=1 // pred_check
      _
    $region7: #{tpu_custom_call.1} parent=1 // pred_check_branch
      %18 = sbr.rel (0) target = $region9
    $region8: #{tpu_custom_call.1} parent=1 // pred_region
      _
    $region9: #{tpu_custom_call.1} parent=1 // pred_fallthru
      _
    // Predicated region
    $region10: #{tpu_custom_call.1} parent=1 // pred_check
      _
    $region11: #{tpu_custom_call.1} parent=1 // pred_check_branch
      %20 = sbr.rel (0) target = $region13
    $region12: #{tpu_custom_call.1} parent=1 // pred_region
      _
    $region13: #{tpu_custom_call.1} parent=1 // pred_fallthru
      _
    // Predicated region
    $region14: #{tpu_custom_call.1} parent=1 // pred_check
      _
    $region15: #{tpu_custom_call.1} parent=1 // pred_check_branch
      %22 = sbr.rel (0) target = $region17
    $region16: #{tpu_custom_call.1} parent=1 // pred_region
      _
    $region17: #{tpu_custom_call.1} parent=1 // pred_fallthru
      _
    // Predicated region
    $region18: #{tpu_custom_call.1} parent=1 // pred_check
      _
    $region19: #{tpu_custom_call.1} parent=1 // pred_check_branch
      %24 = sbr.rel (0) target = $region21
    $region20: #{tpu_custom_call.1} parent=1 // pred_region
      _
    $region21: #{tpu_custom_call.1} parent=1 // pred_fallthru
      _
    // Predicated region
    $region22: #{tpu_custom_call.1} parent=1 // pred_check
      _
    $region23: #{tpu_custom_call.1} parent=1 // pred_check_branch
      %26 = sbr.rel (0) target = $region25
    $region24: #{tpu_custom_call.1} parent=1 // pred_region
      _
    $region25: #{tpu_custom_call.1} parent=1 // pred_fallthru
      _
    // Predicated region
    $region26: #{tpu_custom_call.1} parent=1 // pred_check
      _
    $region27: #{tpu_custom_call.1} parent=1 // pred_check_branch
      %28 = sbr.rel (0) target = $region29
    $region28: #{tpu_custom_call.1} parent=1 // pred_region
      _
    $region29: #{tpu_custom_call.1} parent=1 // pred_fallthru
      _
    // Predicated region
    $region30: #{tpu_custom_call.1} parent=1 // pred_check
      _
    $region31: #{tpu_custom_call.1} parent=1 // pred_check_branch
      %30 = sbr.rel (0) target = $region33
    $region32: #{tpu_custom_call.1} parent=1 // pred_region
      _
    $region33: #{tpu_custom_call.1} parent=1 // pred_fallthru
      _
    // Predicated region
    $region34: #{tpu_custom_call.1} parent=1 // pred_check
      _
    $region35: #{tpu_custom_call.1} parent=1 // pred_check_branch
      %32 = sbr.rel (0) target = $region37
    $region36: #{tpu_custom_call.1} parent=1 // pred_region
      _
    $region37: #{tpu_custom_call.1} parent=1 // pred_fallthru
      _
    %v34 = vld [vmem:[%s0] sm:$0xff]
    %v35 = vld [vmem:[%s1] sm:$0x1]
    %37 = vset.pattern.permute.xlu0 0
    %38 = vperm.xlu0 %37, %v34
    %v39 = vpop.permute.xlu0 %38
    %v41 = vlaneseq
    %v42 = vshrl.u32 %v41, 7
    %v43 = vsub.s32 0, %v42
    %v44 = vrot.slane %v35, %v43
    %v45 = vmul.f32 %v39, %v44
    %v46 = vld [vmem:[%s1 + $0x1] sm:$0x1]
    %47 = vset.pattern.permute.xlu0 1
    %48 = vperm.xlu0 %47, %v34
    %v49 = vpop.permute.xlu0 %48
    %v51 = vlaneseq
    %v52 = vshrl.u32 %v51, 7
    %v53 = vsub.s32 0, %v52
    %v54 = vrot.slane %v46, %v53
    %v55 = vmul.f32 %v49, %v54
    %v56 = vadd.f32 %v45, %v55
    %v57 = vld [vmem:[%s1 + $0x2] sm:$0x1]
    %58 = vset.pattern.permute.xlu0 2
    %59 = vperm.xlu0 %58, %v34
    %v60 = vpop.permute.xlu0 %59
    %v62 = vlaneseq
    %v63 = vshrl.u32 %v62, 7
    %v64 = vsub.s32 0, %v63
    %v65 = vrot.slane %v57, %v64
    %v66 = vmul.f32 %v60, %v65
    %v67 = vadd.f32 %v56, %v66
    %v68 = vld [vmem:[%s1 + $0x3] sm:$0x1]
    %69 = vset.pattern.permute.xlu0 3
    %70 = vperm.xlu0 %69, %v34
    %v71 = vpop.permute.xlu0 %70
    %v73 = vlaneseq
    %v74 = vshrl.u32 %v73, 7
    %v75 = vsub.s32 0, %v74
    %v76 = vrot.slane %v68, %v75
    %v77 = vmul.f32 %v71, %v76
    %v78 = vadd.f32 %v67, %v77
    %v79 = vld [vmem:[%s1 + $0x4] sm:$0x1]
    %80 = vset.pattern.permute.xlu0 4
    %81 = vperm.xlu0 %80, %v34
    %v82 = vpop.permute.xlu0 %81
    %v84 = vlaneseq
    %v85 = vshrl.u32 %v84, 7
    %v86 = vsub.s32 0, %v85
    %v87 = vrot.slane %v79, %v86
    %v88 = vmul.f32 %v82, %v87
    %v89 = vadd.f32 %v78, %v88
    %v90 = vld [vmem:[%s1 + $0x5] sm:$0x1]
    %91 = vset.pattern.permute.xlu0 5
    %92 = vperm.xlu0 %91, %v34
    %v93 = vpop.permute.xlu0 %92
    %v95 = vlaneseq
    %v96 = vshrl.u32 %v95, 7
    %v97 = vsub.s32 0, %v96
    %v98 = vrot.slane %v90, %v97
    %v99 = vmul.f32 %v93, %v98
    %v100 = vadd.f32 %v89, %v99
    %v101 = vld [vmem:[%s1 + $0x6] sm:$0x1]
    %102 = vset.pattern.permute.xlu0 6
    %103 = vperm.xlu0 %102, %v34
    %v104 = vpop.permute.xlu0 %103
    %v106 = vlaneseq
    %v107 = vshrl.u32 %v106, 7
    %v108 = vsub.s32 0, %v107
    %v109 = vrot.slane %v101, %v108
    %v110 = vmul.f32 %v104, %v109
    %v111 = vadd.f32 %v100, %v110
    %v112 = vld [vmem:[%s1 + $0x7] sm:$0x1]
    %113 = vset.pattern.permute.xlu0 7
    %114 = vperm.xlu0 %113, %v34
    %v115 = vpop.permute.xlu0 %114
    %v117 = vlaneseq
    %v118 = vshrl.u32 %v117, 7
    %v119 = vsub.s32 0, %v118
    %v120 = vrot.slane %v112, %v119
    %v121 = vmul.f32 %v115, %v120
    %v122 = vadd.f32 %v111, %v121
    %v123 = vld [vmem:[%s2] sm:$0x1]
    %v125 = vlaneseq
    %v126 = vshrl.u32 %v125, 7
    %v127 = vsub.s32 0, %v126
    %v128 = vrot.slane %v123, %v127
    %v130 = vadd.f32 %v122, %v128
    %vm131 = vcmp.gt.f32.partialorder %v130, 0.0
    %v132 = vmul.f32 %v130, 0.1
    %v133 = vsel %vm131, %v130, %v132
    %v134 = vpack.c.bf16 %v133, %v133
    %v135 = vld [vmem:[%s3] sm:$0xf]
    %v136 = vld [vmem:[%s3 + $0x4] sm:$0xf]
    %v137 = vld [vmem:[%s3 + $0x8] sm:$0xf]
    %v138 = vld [vmem:[%s3 + $0xc] sm:$0xf]
    %v139 = vld [vmem:[%s4] sm:$0x1]
    %v141 = vlaneseq
    %v142 = vshrl.u32 %v141, 7
    %v143 = vsub.s32 0, %v142
    %v144 = vrot.slane %v139, %v143
    %v150 = vunpack.c.l.b16 %v135
    %v151 = vunpack.c.l.b16 %v136
    %v152 = vunpack.c.l.b16 %v137
    %v153 = vunpack.c.l.b16 %v138
    %v154 = vpack.c.b16 %v151, %v150
    %v155 = vpack.c.b16 %v153, %v152
    %vm158 = vcmask 261120
    %v160 = vsel %vm158, %v134, 0
    %162 = vmatprep.subr.bf16.mxu0 0
    %163 = vmatpush1.bf16.msra.mxu0 0
    %164 = vmatprep.subr.bf16.mxu0 0
    %165 = vmatpush1.bf16.msra.mxu0 0
    %166 = vmatprep.subr.bf16.mxu0 0
    %167 = vmatpush1.bf16.msra.mxu0 0
    %168 = vmatprep.subr.bf16.mxu0 0
    %169 = vmatpush1.bf16.msra.mxu0 0
    %170 = vmatprep.subr.bf16.mxu0 0
    %171 = vmatpush1.bf16.msra.mxu0 0
    %172 = vmatprep.subr.bf16.mxu0 0
    %173 = vmatpush1.bf16.msra.mxu0 0
    %174 = vmatprep.subr.bf16.mxu0 0
    %175 = vmatpush1.bf16.msra.mxu0 %v155
    %176 = vmatprep.subr.bf16.mxu0 0
    %177 = vmatpush1.bf16.msra.mxu0 %v154
    %178 = vmatprep.subr.bf16.mxu0 0
    %179 = vmatpush2.bf16.msra.mxu0 0
    %180 = vmatprep.subr.bf16.mxu0 0
    %181 = vmatpush2.bf16.msra.mxu0 0
    %182 = vmatprep.subr.bf16.mxu0 0
    %183 = vmatpush2.bf16.msra.mxu0 0
    %184 = vmatprep.subr.bf16.mxu0 0
    %185 = vmatpush2.bf16.msra.mxu0 0
    %186 = vmatprep.subr.bf16.mxu0 0
    %187 = vmatpush2.bf16.msra.mxu0 0
    %188 = vmatprep.subr.bf16.mxu0 0
    %189 = vmatpush2.bf16.msra.mxu0 0
    %190 = vmatprep.subr.bf16.mxu0 0
    %191 = vmatpush2.bf16.msra.mxu0 0
    %192 = vmatprep.subr.bf16.mxu0 0
    %193 = vmatpush2.bf16.msra.mxu0 0
    %194 = vmatprep.mubr.bf16.mxu0 0
    %195 = vmatmul.mubr.bf16.gmra.mxu0 %v160
    %v196 = vpop.f32.mrf.mxu0
    %v197 = vadd.f32 %v144, %v196
    %v198 = vpop.f32.mrf.mxu0
    %v199 = vpop.f32.mrf.mxu0
    %v200 = vpop.f32.mrf.mxu0
    %201 = vdwg.mxu0
    %vm202 = vcmp.gt.f32.partialorder %v197, 0.0
    %v203 = vmul.f32 %v197, 0.1
    %v204 = vsel %vm202, %v197, %v203
    %v205 = vpack.c.bf16 %v204, %v204
    %v206 = vld [vmem:[%s5] sm:$0xf]
    %v207 = vld [vmem:[%s5 + $0x4] sm:$0xf]
    %v208 = vld [vmem:[%s5 + $0x8] sm:$0xf]
    %v209 = vld [vmem:[%s5 + $0xc] sm:$0xf]
    %v210 = vld [vmem:[%s5 + $0x10] sm:$0xf]
    %v211 = vld [vmem:[%s5 + $0x14] sm:$0xf]
    %v212 = vld [vmem:[%s5 + $0x18] sm:$0xf]
    %v213 = vld [vmem:[%s5 + $0x1c] sm:$0xf]
    %v214 = vld [vmem:[%s6] sm:$0x1]
    %v216 = vlaneseq
    %v217 = vshrl.u32 %v216, 7
    %v218 = vsub.s32 0, %v217
    %v219 = vrot.slane %v214, %v218
    %v229 = vunpack.c.l.b16 %v206
    %v230 = vunpack.c.l.b16 %v207
    %v231 = vunpack.c.l.b16 %v208
    %v232 = vunpack.c.l.b16 %v209
    %v233 = vunpack.c.l.b16 %v210
    %v234 = vunpack.c.l.b16 %v211
    %v235 = vunpack.c.l.b16 %v212
    %v236 = vunpack.c.l.b16 %v213
    %v237 = vpack.c.b16 %v230, %v229
    %v238 = vpack.c.b16 %v232, %v231
    %v239 = vpack.c.b16 %v234, %v233
    %v240 = vpack.c.b16 %v236, %v235
    %vm245 = vcmask 523264
    %v247 = vsel %vm245, %v205, 0
    %249 = vmatprep.subr.bf16.mxu0 0
    %250 = vmatpush1.bf16.msra.mxu0 0
    %251 = vmatprep.subr.bf16.mxu0 0
    %252 = vmatpush1.bf16.msra.mxu0 0
    %253 = vmatprep.subr.bf16.mxu0 0
    %254 = vmatpush1.bf16.msra.mxu0 0
    %255 = vmatprep.subr.bf16.mxu0 0
    %256 = vmatpush1.bf16.msra.mxu0 0
    %257 = vmatprep.subr.bf16.mxu0 0
    %258 = vmatpush1.bf16.msra.mxu0 %v240
    %259 = vmatprep.subr.bf16.mxu0 0
    %260 = vmatpush1.bf16.msra.mxu0 %v239
    %261 = vmatprep.subr.bf16.mxu0 0
    %262 = vmatpush1.bf16.msra.mxu0 %v238
    %263 = vmatprep.subr.bf16.mxu0 0
    %264 = vmatpush1.bf16.msra.mxu0 %v237
    %265 = vmatprep.subr.bf16.mxu0 0
    %266 = vmatpush2.bf16.msra.mxu0 0
    %267 = vmatprep.subr.bf16.mxu0 0
    %268 = vmatpush2.bf16.msra.mxu0 0
    %269 = vmatprep.subr.bf16.mxu0 0
    %270 = vmatpush2.bf16.msra.mxu0 0
    %271 = vmatprep.subr.bf16.mxu0 0
    %272 = vmatpush2.bf16.msra.mxu0 0
    %273 = vmatprep.subr.bf16.mxu0 0
    %274 = vmatpush2.bf16.msra.mxu0 0
    %275 = vmatprep.subr.bf16.mxu0 0
    %276 = vmatpush2.bf16.msra.mxu0 0
    %277 = vmatprep.subr.bf16.mxu0 0
    %278 = vmatpush2.bf16.msra.mxu0 0
    %279 = vmatprep.subr.bf16.mxu0 0
    %280 = vmatpush2.bf16.msra.mxu0 0
    %281 = vmatprep.mubr.bf16.mxu0 0
    %282 = vmatmul.mubr.bf16.gmra.mxu0 %v247
    %v283 = vpop.f32.mrf.mxu0
    %v284 = vadd.f32 %v219, %v283
    %v285 = vpop.f32.mrf.mxu0
    %v286 = vpop.f32.mrf.mxu0
    %v287 = vpop.f32.mrf.mxu0
    %288 = vdwg.mxu0
    %vm289 = vcmp.gt.f32.partialorder %v284, 0.0
    %v290 = vmul.f32 %v284, 0.1
    %v291 = vsel %vm289, %v284, %v290
    %v292 = vpack.c.bf16 %v291, %v291
    %v293 = vld [vmem:[%s7] sm:$0xf]
    %v294 = vld [vmem:[%s7 + $0x4] sm:$0xf]
    %v295 = vld [vmem:[%s7 + $0x8] sm:$0xf]
    %v296 = vld [vmem:[%s7 + $0xc] sm:$0xf]
    %v297 = vld [vmem:[%s7 + $0x10] sm:$0xf]
    %v298 = vld [vmem:[%s7 + $0x14] sm:$0xf]
    %v299 = vld [vmem:[%s7 + $0x18] sm:$0xf]
    %v300 = vld [vmem:[%s7 + $0x1c] sm:$0xf]
    %v301 = vld [vmem:[%s7 + $0x20] sm:$0xf]
    %v302 = vld [vmem:[%s7 + $0x24] sm:$0xf]
    %v303 = vld [vmem:[%s7 + $0x28] sm:$0xf]
    %v304 = vld [vmem:[%s7 + $0x2c] sm:$0xf]
    %v305 = vld [vmem:[%s7 + $0x30] sm:$0xf]
    %v306 = vld [vmem:[%s7 + $0x34] sm:$0xf]
    %v307 = vld [vmem:[%s7 + $0x38] sm:$0xf]
    %v308 = vld [vmem:[%s7 + $0x3c] sm:$0xf]
    %v309 = vld [vmem:[%s8] sm:$0x1]
    %v311 = vlaneseq
    %v312 = vshrl.u32 %v311, 7
    %v313 = vsub.s32 0, %v312
    %v314 = vrot.slane %v309, %v313
    %v332 = vunpack.c.l.b16 %v293
    %v333 = vunpack.c.l.b16 %v294
    %v334 = vunpack.c.l.b16 %v295
    %v335 = vunpack.c.l.b16 %v296
    %v336 = vunpack.c.l.b16 %v297
    %v337 = vunpack.c.l.b16 %v298
    %v338 = vunpack.c.l.b16 %v299
    %v339 = vunpack.c.l.b16 %v300
    %v340 = vunpack.c.l.b16 %v301
    %v341 = vunpack.c.l.b16 %v302
    %v342 = vunpack.c.l.b16 %v303
    %v343 = vunpack.c.l.b16 %v304
    %v344 = vunpack.c.l.b16 %v305
    %v345 = vunpack.c.l.b16 %v306
    %v346 = vunpack.c.l.b16 %v307
    %v347 = vunpack.c.l.b16 %v308
    %v348 = vpack.c.b16 %v333, %v332
    %v349 = vpack.c.b16 %v335, %v334
    %v350 = vpack.c.b16 %v337, %v336
    %v351 = vpack.c.b16 %v339, %v338
    %v352 = vpack.c.b16 %v341, %v340
    %v353 = vpack.c.b16 %v343, %v342
    %v354 = vpack.c.b16 %v345, %v344
    %v355 = vpack.c.b16 %v347, %v346
    %364 = vmatprep.subr.bf16.mxu0 0
    %365 = vmatpush1.bf16.msra.mxu0 %v355
    %366 = vmatprep.subr.bf16.mxu0 0
    %367 = vmatpush1.bf16.msra.mxu0 %v354
    %368 = vmatprep.subr.bf16.mxu0 0
    %369 = vmatpush1.bf16.msra.mxu0 %v353
    %370 = vmatprep.subr.bf16.mxu0 0
    %371 = vmatpush1.bf16.msra.mxu0 %v352
    %372 = vmatprep.subr.bf16.mxu0 0
    %373 = vmatpush1.bf16.msra.mxu0 %v351
    %374 = vmatprep.subr.bf16.mxu0 0
    %375 = vmatpush1.bf16.msra.mxu0 %v350
    %376 = vmatprep.subr.bf16.mxu0 0
    %377 = vmatpush1.bf16.msra.mxu0 %v349
    %378 = vmatprep.subr.bf16.mxu0 0
    %379 = vmatpush1.bf16.msra.mxu0 %v348
    %380 = vmatprep.subr.bf16.mxu0 0
    %381 = vmatpush2.bf16.msra.mxu0 0
    %382 = vmatprep.subr.bf16.mxu0 0
    %383 = vmatpush2.bf16.msra.mxu0 0
    %384 = vmatprep.subr.bf16.mxu0 0
    %385 = vmatpush2.bf16.msra.mxu0 0
    %386 = vmatprep.subr.bf16.mxu0 0
    %387 = vmatpush2.bf16.msra.mxu0 0
    %388 = vmatprep.subr.bf16.mxu0 0
    %389 = vmatpush2.bf16.msra.mxu0 0
    %390 = vmatprep.subr.bf16.mxu0 0
    %391 = vmatpush2.bf16.msra.mxu0 0
    %392 = vmatprep.subr.bf16.mxu0 0
    %393 = vmatpush2.bf16.msra.mxu0 0
    %394 = vmatprep.subr.bf16.mxu0 0
    %395 = vmatpush2.bf16.msra.mxu0 0
    %396 = vmatprep.mubr.bf16.mxu0 0
    %397 = vmatmul.mubr.bf16.gmra.mxu0 %v292
    %v398 = vpop.f32.mrf.mxu0
    %v399 = vadd.f32 %v314, %v398
    %v400 = vpop.f32.mrf.mxu0
    %v401 = vpop.f32.mrf.mxu0
    %v402 = vpop.f32.mrf.mxu0
    %403 = vdwg.mxu0
    %vm404 = vcmp.gt.f32.partialorder %v399, 0.0
    %v405 = vmul.f32 %v399, 0.1
    %v406 = vsel %vm404, %v399, %v405
    %407 = vst.msk [vmem:[#allocation2] sm:$0xff] %vm245, %v406
    // Predicated region
    $region38: #{tpu_custom_call.1} parent=1 // pred_check
      _
    $region39: #{tpu_custom_call.1} parent=1 // pred_check_branch
      %409 = sbr.rel (0) target = $region41
    $region40: #{tpu_custom_call.1} parent=1 // pred_region
      %s411 = ssub.s32 128, 128
      %412 = vsyncadd [#allocation3], %s411
      %s414 = sshll.u32 [#allocation2], 4
      %s415 = int_to_ptr.vmem [resolvable:$true] %s414
      %417 = dma.vmem_to_hbm [thread:$0]  %s415, 128, %s9, [#allocation3]
    $region41: #{tpu_custom_call.1} parent=1 // pred_fallthru
      _
    // Predicated region
    $region42: #{tpu_custom_call.1} parent=1 // pred_check
      _
    $region43: #{tpu_custom_call.1} parent=1 // pred_check_branch
      %419 = sbr.rel (0) target = $region45
    $region44: #{tpu_custom_call.1} parent=1 // pred_region
      %420 = dma.done [#allocation3], 128
    $region45: #{tpu_custom_call.1} parent=1 // pred_fallthru
      _
    %421 = vsyncpa [#allocation3], 1

// kernel: tpu_custom_call.1
$region0: #{tpu_custom_call.1}
  #allocation0 [shape = 'u32[]', space=smem, size = 0x4, offset = 0x4, fixed_abs, tag = 'smem constant byte address 0x4 - core index']
  #allocation1 [shape = 'u32[144,128]{1,0:T(1,128)}', space=vmem, size = 0x12000, scoped, tag = 'internal scratch']
  %s0 = inlined_call_operand.vmem [shape: f32[8,8], index: 0, kind: input, shape index: {}]
  %s1 = inlined_call_operand.vmem [shape: f32[8,32], index: 1, kind: input, shape index: {}]
  %s2 = inlined_call_operand.vmem [shape: f32[1,32], index: 2, kind: input, shape index: {}]
  %s3 = inlined_call_operand.vmem [shape: bf16[32,64], index: 3, kind: input, shape index: {}]
  %s4 = inlined_call_operand.vmem [shape: f32[1,64], index: 4, kind: input, shape index: {}]
  %s5 = inlined_call_operand.vmem [shape: bf16[64,128], index: 5, kind: input, shape index: {}]
  %s6 = inlined_call_operand.vmem [shape: f32[1,128], index: 6, kind: input, shape index: {}]
  %s7 = inlined_call_operand.vmem [shape: bf16[128,64], index: 7, kind: input, shape index: {}]
  %s8 = inlined_call_operand.vmem [shape: f32[1,64], index: 8, kind: input, shape index: {}]
  %s9 = inlined_call_operand.hbm [shape: f32[8,64], index: 9, kind: output, shape index: {}]
  %s10 = sld [smem:[#allocation0]]
  $region46: #{tpu_custom_call.1} parent=0
    _
  %s12 = ssub.s32 1, %s10
  %s13 = scalar_select 0, %s12, %s10
  $region1: #{tpu_custom_call.1} parent=0
    #allocation2 [shape = 'u8[4096]{0}', space=vmem, size = 0x1000, scoped, tag = 'output window, operand 0, single buffered']
    #allocation3 [shape = 's32[1]{0}', space=sflag, size = 0x4, scoped, tag = 'scoped memory for tpu_custom_call.1']
    %14 = vsyncpa [#allocation3], 0
    // Predicated region
    $region2: #{tpu_custom_call.1} parent=1 // pred_check
      _
    $region3: #{tpu_custom_call.1} parent=1 // pred_check_branch
      %16 = sbr.rel (0) target = $region5
    $region4: #{tpu_custom_call.1} parent=1 // pred_region
      _
    $region5: #{tpu_custom_call.1} parent=1 // pred_fallthru
      _
    // Predicated region
    $region6: #{tpu_custom_call.1} parent=1 // pred_check
      _
    $region7: #{tpu_custom_call.1} parent=1 // pred_check_branch
      %18 = sbr.rel (0) target = $region9
    $region8: #{tpu_custom_call.1} parent=1 // pred_region
      _
    $region9: #{tpu_custom_call.1} parent=1 // pred_fallthru
      _
    // Predicated region
    $region10: #{tpu_custom_call.1} parent=1 // pred_check
      _
    $region11: #{tpu_custom_call.1} parent=1 // pred_check_branch
      %20 = sbr.rel (0) target = $region13
    $region12: #{tpu_custom_call.1} parent=1 // pred_region
      _
    $region13: #{tpu_custom_call.1} parent=1 // pred_fallthru
      _
    // Predicated region
    $region14: #{tpu_custom_call.1} parent=1 // pred_check
      _
    $region15: #{tpu_custom_call.1} parent=1 // pred_check_branch
      %22 = sbr.rel (0) target = $region17
    $region16: #{tpu_custom_call.1} parent=1 // pred_region
      _
    $region17: #{tpu_custom_call.1} parent=1 // pred_fallthru
      _
    // Predicated region
    $region18: #{tpu_custom_call.1} parent=1 // pred_check
      _
    $region19: #{tpu_custom_call.1} parent=1 // pred_check_branch
      %24 = sbr.rel (0) target = $region21
    $region20: #{tpu_custom_call.1} parent=1 // pred_region
      _
    $region21: #{tpu_custom_call.1} parent=1 // pred_fallthru
      _
    // Predicated region
    $region22: #{tpu_custom_call.1} parent=1 // pred_check
      _
    $region23: #{tpu_custom_call.1} parent=1 // pred_check_branch
      %26 = sbr.rel (0) target = $region25
    $region24: #{tpu_custom_call.1} parent=1 // pred_region
      _
    $region25: #{tpu_custom_call.1} parent=1 // pred_fallthru
      _
    // Predicated region
    $region26: #{tpu_custom_call.1} parent=1 // pred_check
      _
    $region27: #{tpu_custom_call.1} parent=1 // pred_check_branch
      %28 = sbr.rel (0) target = $region29
    $region28: #{tpu_custom_call.1} parent=1 // pred_region
      _
    $region29: #{tpu_custom_call.1} parent=1 // pred_fallthru
      _
    // Predicated region
    $region30: #{tpu_custom_call.1} parent=1 // pred_check
      _
    $region31: #{tpu_custom_call.1} parent=1 // pred_check_branch
      %30 = sbr.rel (0) target = $region33
    $region32: #{tpu_custom_call.1} parent=1 // pred_region
      _
    $region33: #{tpu_custom_call.1} parent=1 // pred_fallthru
      _
    // Predicated region
    $region34: #{tpu_custom_call.1} parent=1 // pred_check
      _
    $region35: #{tpu_custom_call.1} parent=1 // pred_check_branch
      %32 = sbr.rel (0) target = $region37
    $region36: #{tpu_custom_call.1} parent=1 // pred_region
      _
    $region37: #{tpu_custom_call.1} parent=1 // pred_fallthru
      _
    %v34 = vld [vmem:[%s0] sm:$0xff]
    %v35 = vld [vmem:[%s1] sm:$0x1]
    %37 = vset.pattern.permute.xlu0 0
    %38 = vperm.xlu0 %37, %v34
    %v39 = vpop.permute.xlu0 %38
    %v41 = vlaneseq
    %v42 = vshrl.u32 %v41, 7
    %v43 = vsub.s32 0, %v42
    %v44 = vrot.slane %v35, %v43
    %v45 = vmul.f32 %v39, %v44
    %v46 = vld [vmem:[%s1 + $0x1] sm:$0x1]
    %47 = vset.pattern.permute.xlu0 1
    %48 = vperm.xlu0 %47, %v34
    %v49 = vpop.permute.xlu0 %48
    %v51 = vlaneseq
    %v52 = vshrl.u32 %v51, 7
    %v53 = vsub.s32 0, %v52
    %v54 = vrot.slane %v46, %v53
    %v55 = vmul.f32 %v49, %v54
    %v56 = vadd.f32 %v45, %v55
    %v57 = vld [vmem:[%s1 + $0x2] sm:$0x1]
    %58 = vset.pattern.permute.xlu0 2
    %59 = vperm.xlu0 %58, %v34
    %v60 = vpop.permute.xlu0 %59
    %v62 = vlaneseq
    %v63 = vshrl.u32 %v62, 7
    %v64 = vsub.s32 0, %v63
    %v65 = vrot.slane %v57, %v64
    %v66 = vmul.f32 %v60, %v65
    %v67 = vadd.f32 %v56, %v66
    %v68 = vld [vmem:[%s1 + $0x3] sm:$0x1]
    %69 = vset.pattern.permute.xlu0 3
    %70 = vperm.xlu0 %69, %v34
    %v71 = vpop.permute.xlu0 %70
    %v73 = vlaneseq
    %v74 = vshrl.u32 %v73, 7
    %v75 = vsub.s32 0, %v74
    %v76 = vrot.slane %v68, %v75
    %v77 = vmul.f32 %v71, %v76
    %v78 = vadd.f32 %v67, %v77
    %v79 = vld [vmem:[%s1 + $0x4] sm:$0x1]
    %80 = vset.pattern.permute.xlu0 4
    %81 = vperm.xlu0 %80, %v34
    %v82 = vpop.permute.xlu0 %81
    %v84 = vlaneseq
    %v85 = vshrl.u32 %v84, 7
    %v86 = vsub.s32 0, %v85
    %v87 = vrot.slane %v79, %v86
    %v88 = vmul.f32 %v82, %v87
    %v89 = vadd.f32 %v78, %v88
    %v90 = vld [vmem:[%s1 + $0x5] sm:$0x1]
    %91 = vset.pattern.permute.xlu0 5
    %92 = vperm.xlu0 %91, %v34
    %v93 = vpop.permute.xlu0 %92
    %v95 = vlaneseq
    %v96 = vshrl.u32 %v95, 7
    %v97 = vsub.s32 0, %v96
    %v98 = vrot.slane %v90, %v97
    %v99 = vmul.f32 %v93, %v98
    %v100 = vadd.f32 %v89, %v99
    %v101 = vld [vmem:[%s1 + $0x6] sm:$0x1]
    %102 = vset.pattern.permute.xlu0 6
    %103 = vperm.xlu0 %102, %v34
    %v104 = vpop.permute.xlu0 %103
    %v106 = vlaneseq
    %v107 = vshrl.u32 %v106, 7
    %v108 = vsub.s32 0, %v107
    %v109 = vrot.slane %v101, %v108
    %v110 = vmul.f32 %v104, %v109
    %v111 = vadd.f32 %v100, %v110
    %v112 = vld [vmem:[%s1 + $0x7] sm:$0x1]
    %113 = vset.pattern.permute.xlu0 7
    %114 = vperm.xlu0 %113, %v34
    %v115 = vpop.permute.xlu0 %114
    %v117 = vlaneseq
    %v118 = vshrl.u32 %v117, 7
    %v119 = vsub.s32 0, %v118
    %v120 = vrot.slane %v112, %v119
    %v121 = vmul.f32 %v115, %v120
    %v122 = vadd.f32 %v111, %v121
    %v123 = vld [vmem:[%s2] sm:$0x1]
    %v125 = vlaneseq
    %v126 = vshrl.u32 %v125, 7
    %v127 = vsub.s32 0, %v126
    %v128 = vrot.slane %v123, %v127
    %v130 = vadd.f32 %v122, %v128
    %vm131 = vcmp.gt.f32.partialorder %v130, 0.0
    %v132 = vmul.f32 %v130, 0.1
    %v133 = vsel %vm131, %v130, %v132
    %v134 = vpack.c.bf16 %v133, %v133
    %v135 = vld [vmem:[%s3] sm:$0xf]
    %v136 = vld [vmem:[%s3 + $0x4] sm:$0xf]
    %v137 = vld [vmem:[%s3 + $0x8] sm:$0xf]
    %v138 = vld [vmem:[%s3 + $0xc] sm:$0xf]
    %v139 = vld [vmem:[%s4] sm:$0x1]
    %v141 = vlaneseq
    %v142 = vshrl.u32 %v141, 7
    %v143 = vsub.s32 0, %v142
    %v144 = vrot.slane %v139, %v143
    %v150 = vunpack.c.l.b16 %v135
    %v151 = vunpack.c.l.b16 %v136
    %v152 = vunpack.c.l.b16 %v137
    %v153 = vunpack.c.l.b16 %v138
    %v154 = vpack.c.b16 %v151, %v150
    %v155 = vpack.c.b16 %v153, %v152
    %vm158 = vcmask 261120
    %v160 = vsel %vm158, %v134, 0
    %162 = vmatprep.subr.bf16.mxu0 0
    %163 = vmatpush1.bf16.msra.mxu0 0
    %164 = vmatprep.subr.bf16.mxu0 0
    %165 = vmatpush1.bf16.msra.mxu0 0
    %166 = vmatprep.subr.bf16.mxu0 0
    %167 = vmatpush1.bf16.msra.mxu0 0
    %168 = vmatprep.subr.bf16.mxu0 0
    %169 = vmatpush1.bf16.msra.mxu0 0
    %170 = vmatprep.subr.bf16.mxu0 0
    %171 = vmatpush1.bf16.msra.mxu0 0
    %172 = vmatprep.subr.bf16.mxu0 0
    %173 = vmatpush1.bf16.msra.mxu0 0
    %174 = vmatprep.subr.bf16.mxu0 0
    %175 = vmatpush1.bf16.msra.mxu0 %v155
    %176 = vmatprep.subr.bf16.mxu0 0
    %177 = vmatpush1.bf16.msra.mxu0 %v154
    %178 = vmatprep.subr.bf16.mxu0 0
    %179 = vmatpush2.bf16.msra.mxu0 0
    %180 = vmatprep.subr.bf16.mxu0 0
    %181 = vmatpush2.bf16.msra.mxu0 0
    %182 = vmatprep.subr.bf16.mxu0 0
    %183 = vmatpush2.bf16.msra.mxu0 0
    %184 = vmatprep.subr.bf16.mxu0 0
    %185 = vmatpush2.bf16.msra.mxu0 0
    %186 = vmatprep.subr.bf16.mxu0 0
    %187 = vmatpush2.bf16.msra.mxu0 0
    %188 = vmatprep.subr.bf16.mxu0 0
    %189 = vmatpush2.bf16.msra.mxu0 0
    %190 = vmatprep.subr.bf16.mxu0 0
    %191 = vmatpush2.bf16.msra.mxu0 0
    %192 = vmatprep.subr.bf16.mxu0 0
    %193 = vmatpush2.bf16.msra.mxu0 0
    %194 = vmatprep.mubr.bf16.mxu0 0
    %195 = vmatmul.mubr.bf16.gmra.mxu0 %v160
    %v196 = vpop.f32.mrf.mxu0
    %v197 = vadd.f32 %v144, %v196
    %v198 = vpop.f32.mrf.mxu0
    %v199 = vpop.f32.mrf.mxu0
    %v200 = vpop.f32.mrf.mxu0
    %201 = vdwg.mxu0
    %vm202 = vcmp.gt.f32.partialorder %v197, 0.0
    %v203 = vmul.f32 %v197, 0.1
    %v204 = vsel %vm202, %v197, %v203
    %v205 = vpack.c.bf16 %v204, %v204
    %v206 = vld [vmem:[%s5] sm:$0xf]
    %v207 = vld [vmem:[%s5 + $0x4] sm:$0xf]
    %v208 = vld [vmem:[%s5 + $0x8] sm:$0xf]
    %v209 = vld [vmem:[%s5 + $0xc] sm:$0xf]
    %v210 = vld [vmem:[%s5 + $0x10] sm:$0xf]
    %v211 = vld [vmem:[%s5 + $0x14] sm:$0xf]
    %v212 = vld [vmem:[%s5 + $0x18] sm:$0xf]
    %v213 = vld [vmem:[%s5 + $0x1c] sm:$0xf]
    %v214 = vld [vmem:[%s6] sm:$0x1]
    %v216 = vlaneseq
    %v217 = vshrl.u32 %v216, 7
    %v218 = vsub.s32 0, %v217
    %v219 = vrot.slane %v214, %v218
    %v229 = vunpack.c.l.b16 %v206
    %v230 = vunpack.c.l.b16 %v207
    %v231 = vunpack.c.l.b16 %v208
    %v232 = vunpack.c.l.b16 %v209
    %v233 = vunpack.c.l.b16 %v210
    %v234 = vunpack.c.l.b16 %v211
    %v235 = vunpack.c.l.b16 %v212
    %v236 = vunpack.c.l.b16 %v213
    %v237 = vpack.c.b16 %v230, %v229
    %v238 = vpack.c.b16 %v232, %v231
    %v239 = vpack.c.b16 %v234, %v233
    %v240 = vpack.c.b16 %v236, %v235
    %vm245 = vcmask 523264
    %v247 = vsel %vm245, %v205, 0
    %249 = vmatprep.subr.bf16.mxu0 0
    %250 = vmatpush1.bf16.msra.mxu0 0
    %251 = vmatprep.subr.bf16.mxu0 0
    %252 = vmatpush1.bf16.msra.mxu0 0
    %253 = vmatprep.subr.bf16.mxu0 0
    %254 = vmatpush1.bf16.msra.mxu0 0
    %255 = vmatprep.subr.bf16.mxu0 0
    %256 = vmatpush1.bf16.msra.mxu0 0
    %257 = vmatprep.subr.bf16.mxu0 0
    %258 = vmatpush1.bf16.msra.mxu0 %v240
    %259 = vmatprep.subr.bf16.mxu0 0
    %260 = vmatpush1.bf16.msra.mxu0 %v239
    %261 = vmatprep.subr.bf16.mxu0 0
    %262 = vmatpush1.bf16.msra.mxu0 %v238
    %263 = vmatprep.subr.bf16.mxu0 0
    %264 = vmatpush1.bf16.msra.mxu0 %v237
    %265 = vmatprep.subr.bf16.mxu0 0
    %266 = vmatpush2.bf16.msra.mxu0 0
    %267 = vmatprep.subr.bf16.mxu0 0
    %268 = vmatpush2.bf16.msra.mxu0 0
    %269 = vmatprep.subr.bf16.mxu0 0
    %270 = vmatpush2.bf16.msra.mxu0 0
    %271 = vmatprep.subr.bf16.mxu0 0
    %272 = vmatpush2.bf16.msra.mxu0 0
    %273 = vmatprep.subr.bf16.mxu0 0
    %274 = vmatpush2.bf16.msra.mxu0 0
    %275 = vmatprep.subr.bf16.mxu0 0
    %276 = vmatpush2.bf16.msra.mxu0 0
    %277 = vmatprep.subr.bf16.mxu0 0
    %278 = vmatpush2.bf16.msra.mxu0 0
    %279 = vmatprep.subr.bf16.mxu0 0
    %280 = vmatpush2.bf16.msra.mxu0 0
    %281 = vmatprep.mubr.bf16.mxu0 0
    %282 = vmatmul.mubr.bf16.gmra.mxu0 %v247
    %v283 = vpop.f32.mrf.mxu0
    %v284 = vadd.f32 %v219, %v283
    %v285 = vpop.f32.mrf.mxu0
    %v286 = vpop.f32.mrf.mxu0
    %v287 = vpop.f32.mrf.mxu0
    %288 = vdwg.mxu0
    %vm289 = vcmp.gt.f32.partialorder %v284, 0.0
    %v290 = vmul.f32 %v284, 0.1
    %v291 = vsel %vm289, %v284, %v290
    %v292 = vpack.c.bf16 %v291, %v291
    %v293 = vld [vmem:[%s7] sm:$0xf]
    %v294 = vld [vmem:[%s7 + $0x4] sm:$0xf]
    %v295 = vld [vmem:[%s7 + $0x8] sm:$0xf]
    %v296 = vld [vmem:[%s7 + $0xc] sm:$0xf]
    %v297 = vld [vmem:[%s7 + $0x10] sm:$0xf]
    %v298 = vld [vmem:[%s7 + $0x14] sm:$0xf]
    %v299 = vld [vmem:[%s7 + $0x18] sm:$0xf]
    %v300 = vld [vmem:[%s7 + $0x1c] sm:$0xf]
    %v301 = vld [vmem:[%s7 + $0x20] sm:$0xf]
    %v302 = vld [vmem:[%s7 + $0x24] sm:$0xf]
    %v303 = vld [vmem:[%s7 + $0x28] sm:$0xf]
    %v304 = vld [vmem:[%s7 + $0x2c] sm:$0xf]
    %v305 = vld [vmem:[%s7 + $0x30] sm:$0xf]
    %v306 = vld [vmem:[%s7 + $0x34] sm:$0xf]
    %v307 = vld [vmem:[%s7 + $0x38] sm:$0xf]
    %v308 = vld [vmem:[%s7 + $0x3c] sm:$0xf]
    %v309 = vld [vmem:[%s8] sm:$0x1]
    %v311 = vlaneseq
    %v312 = vshrl.u32 %v311, 7
    %v313 = vsub.s32 0, %v312
    %v314 = vrot.slane %v309, %v313
    %v332 = vunpack.c.l.b16 %v293
    %v333 = vunpack.c.l.b16 %v294
    %v334 = vunpack.c.l.b16 %v295
    %v335 = vunpack.c.l.b16 %v296
    %v336 = vunpack.c.l.b16 %v297
    %v337 = vunpack.c.l.b16 %v298
    %v338 = vunpack.c.l.b16 %v299
    %v339 = vunpack.c.l.b16 %v300
    %v340 = vunpack.c.l.b16 %v301
    %v341 = vunpack.c.l.b16 %v302
    %v342 = vunpack.c.l.b16 %v303
    %v343 = vunpack.c.l.b16 %v304
    %v344 = vunpack.c.l.b16 %v305
    %v345 = vunpack.c.l.b16 %v306
    %v346 = vunpack.c.l.b16 %v307
    %v347 = vunpack.c.l.b16 %v308
    %v348 = vpack.c.b16 %v333, %v332
    %v349 = vpack.c.b16 %v335, %v334
    %v350 = vpack.c.b16 %v337, %v336
    %v351 = vpack.c.b16 %v339, %v338
    %v352 = vpack.c.b16 %v341, %v340
    %v353 = vpack.c.b16 %v343, %v342
    %v354 = vpack.c.b16 %v345, %v344
    %v355 = vpack.c.b16 %v347, %v346
    %364 = vmatprep.subr.bf16.mxu0 0
    %365 = vmatpush1.bf16.msra.mxu0 %v355
    %366 = vmatprep.subr.bf16.mxu0 0
    %367 = vmatpush1.bf16.msra.mxu0 %v354
    %368 = vmatprep.subr.bf16.mxu0 0
    %369 = vmatpush1.bf16.msra.mxu0 %v353
    %370 = vmatprep.subr.bf16.mxu0 0
    %371 = vmatpush1.bf16.msra.mxu0 %v352
    %372 = vmatprep.subr.bf16.mxu0 0
    %373 = vmatpush1.bf16.msra.mxu0 %v351
    %374 = vmatprep.subr.bf16.mxu0 0
    %375 = vmatpush1.bf16.msra.mxu0 %v350
    %376 = vmatprep.subr.bf16.mxu0 0
    %377 = vmatpush1.bf16.msra.mxu0 %v349
    %378 = vmatprep.subr.bf16.mxu0 0
    %379 = vmatpush1.bf16.msra.mxu0 %v348
    %380 = vmatprep.subr.bf16.mxu0 0
    %381 = vmatpush2.bf16.msra.mxu0 0
    %382 = vmatprep.subr.bf16.mxu0 0
    %383 = vmatpush2.bf16.msra.mxu0 0
    %384 = vmatprep.subr.bf16.mxu0 0
    %385 = vmatpush2.bf16.msra.mxu0 0
    %386 = vmatprep.subr.bf16.mxu0 0
    %387 = vmatpush2.bf16.msra.mxu0 0
    %388 = vmatprep.subr.bf16.mxu0 0
    %389 = vmatpush2.bf16.msra.mxu0 0
    %390 = vmatprep.subr.bf16.mxu0 0
    %391 = vmatpush2.bf16.msra.mxu0 0
    %392 = vmatprep.subr.bf16.mxu0 0
    %393 = vmatpush2.bf16.msra.mxu0 0
    %394 = vmatprep.subr.bf16.mxu0 0
    %395 = vmatpush2.bf16.msra.mxu0 0
    %396 = vmatprep.mubr.bf16.mxu0 0
    %397 = vmatmul.mubr.bf16.gmra.mxu0 %v292
    %v398 = vpop.f32.mrf.mxu0
    %v399 = vadd.f32 %v314, %v398
    %v400 = vpop.f32.mrf.mxu0
    %v401 = vpop.f32.mrf.mxu0
    %v402 = vpop.f32.mrf.mxu0
    %403 = vdwg.mxu0
    %vm404 = vcmp.gt.f32.partialorder %v399, 0.0
    %v405 = vmul.f32 %v399, 0.1
    %v406 = vsel %vm404, %v399, %v405
    %407 = vst.msk [vmem:[#allocation2] sm:$0xff] %vm245, %v406
    // Predicated region
    $region38: #{tpu_custom_call.1} parent=1 // pred_check
      _
    $region39: #{tpu_custom_call.1} parent=1 // pred_check_branch
      %409 = sbr.rel (0) target = $region41
    $region40: #{tpu_custom_call.1} parent=1 // pred_region
      %s411 = ssub.s32 128, 128
      %412 = vsyncadd [#allocation3], %s411
      %s414 = sshll.u32 [#allocation2], 4
      %s415 = int_to_ptr.vmem [resolvable:$true] %s414
      %417 = dma.vmem_to_hbm [thread:$0]  %s415, 128, %s9, [#allocation3]
    $region41: #{tpu_custom_call.1} parent=1 // pred_fallthru
      _
    // Predicated region
    $region42: #{tpu_custom_call.1} parent=1 // pred_check
      _
    $region43: #{tpu_custom_call.1} parent=1 // pred_check_branch
      %419 = sbr.rel (0) target = $region45
    $region44: #{tpu_custom_call.1} parent=1 // pred_region
      %420 = dma.done [#allocation3], 128
    $region45: #{tpu_custom_call.1} parent=1 // pred_fallthru
      _
    %421 = vsyncpa [#allocation3], 1

</llo_original>
